<compile_context>
chip_gen: v7x
topology: tpu7x:2x2x1
jax: 0.10.0
libtpu: 0.0.40
codegen_flags: <defaults>
</compile_context>

<pallas_src>
import jax
import jax.numpy as jnp
from jax import lax
from jax.experimental import pallas as pl
from jax.experimental.pallas import tpu as pltpu

LANE = 128                 # feature dim padded to a multiple of this
MAX_TILE = 512             # aggregation row / reduction tile cap
MAX_TILE_BN = 1024         # BN-apply row tile cap (elementwise pass)
# Safe on all generations: v5e/v6e have 128 MiB physical VMEM, v7x has 64 MiB.
_VMEM_LIMIT_BYTES = 48 * 1024 * 1024


def _round_up(x, m):
    return (x + m - 1) // m * m


def _pick_tile(n_pad, max_tile):
    """Largest multiple of 128 that divides n_pad, capped at max_tile."""
    t = max(LANE, (min(max_tile, n_pad) // LANE) * LANE)
    while n_pad % t != 0:
        t -= LANE
    return t


# ----------------------------- Pallas kernels --------------------------------
def _gcn_agg_kernel(a_ref, x_ref, wt_ref, b_ref, h_ref, acc_ref):
    # All grid-position reads at kernel top level (never inside pl.when bodies).
    k = pl.program_id(1)
    k_last = pl.num_programs(1) - 1

    @pl.when(k == 0)
    def _():
        acc_ref[...] = jnp.zeros_like(acc_ref)

    # Fused XW tile: (tk, cin) @ (cin, cout_pad). cin is tiny, so recomputing
    # this per grid step is far cheaper than re-streaming a precomputed XW.
    xw = jnp.dot(x_ref[...], wt_ref[...], preferred_element_type=jnp.float32)
    # out[dst_tile] += A_hat[dst_tile, src_tile] @ XW[src_tile]
    acc_ref[...] += jnp.dot(a_ref[...], xw.astype(jnp.bfloat16),
                            preferred_element_type=jnp.float32)

    @pl.when(k == k_last)
    def _():
        h = acc_ref[...] + b_ref[...]            # GCNConv bias
        h = jnp.where(h >= 0.0, h, 0.1 * h)      # LeakyReLU(0.1)
        h_ref[...] = h.astype(h_ref.dtype)       # bf16 writeback


def _bn_apply_kernel(h_ref, scale_ref, shift_ref, o_ref):
    o_ref[...] = h_ref[...].astype(jnp.float32) * scale_ref[...] + shift_ref[...]


# ------------------------------ forward wrapper -------------------------------
def convblock_forward(a_hat, x, weight, bias, gamma, beta):
    """a_hat: [N, N] normalized dense adjacency (f32); x: [N, Cin];
    weight: [Cout, Cin]; bias/gamma/beta: [Cout]. Returns [N, Cout] f32."""
    n, cin = x.shape
    cout = weight.shape[0]

    n_pad = _round_up(n, LANE)
    cout_pad = _round_up(cout, LANE)
    tk = _pick_tile(n_pad, MAX_TILE)
    # Prefer >=2 row tiles when possible (keeps both v7x TensorCores busy).
    tm_cap = min(MAX_TILE, n_pad // 2) if n_pad >= 2 * LANE else MAX_TILE
    tm = _pick_tile(n_pad, tm_cap)
    nt_i = n_pad // tm
    nt_k = n_pad // tk

    # Fused pad + f32->bf16 cast of A_hat (single pass; dominant wrapper cost).
    if n == n_pad:
        a_bf16 = a_hat.astype(jnp.bfloat16)
        x_p = x.astype(jnp.float32)
    else:
        a_bf16 = (jnp.zeros((n_pad, n_pad), jnp.bfloat16)
                  .at[:n, :n].set(a_hat.astype(jnp.bfloat16)))
        x_p = jnp.zeros((n_pad, cin), jnp.float32).at[:n, :].set(x)
    wt_p = jnp.zeros((cin, cout_pad), jnp.float32).at[:, :cout].set(weight.T)
    b_p = jnp.zeros((1, cout_pad), jnp.float32).at[0, :cout].set(bias)
    g_p = jnp.zeros((cout_pad,), jnp.float32).at[:cout].set(gamma)
    be_p = jnp.zeros((cout_pad,), jnp.float32).at[:cout].set(beta)

    # --- 1) fused aggregation: H = LeakyReLU(A_hat @ (X @ W^T) + b), bf16 -----
    h = pl.pallas_call(
        _gcn_agg_kernel,
        out_shape=jax.ShapeDtypeStruct((n_pad, cout_pad), jnp.bfloat16),
        grid=(nt_i, nt_k),
        in_specs=[
            pl.BlockSpec((tm, tk), lambda i, k: (i, k)),          # A_hat tile
            pl.BlockSpec((tk, cin), lambda i, k: (k, 0)),         # X tile (tiny)
            pl.BlockSpec((cin, cout_pad), lambda i, k: (0, 0)),   # W^T resident
            pl.BlockSpec((1, cout_pad), lambda i, k: (0, 0)),     # bias resident
        ],
        out_specs=pl.BlockSpec((tm, cout_pad), lambda i, k: (i, 0)),
        scratch_shapes=[pltpu.VMEM((tm, cout_pad), jnp.float32)],
        compiler_params=pltpu.CompilerParams(
            dimension_semantics=("parallel", "arbitrary"),
            vmem_limit_bytes=_VMEM_LIMIT_BYTES),
    )(a_bf16, x_p, wt_p, b_p)

    # --- 2) BatchNorm1d training-mode stats (centered variance, f32 glue) -----
    h_valid = h[:n, :].astype(jnp.float32)
    mean = jnp.mean(h_valid, axis=0)
    var = jnp.mean(jnp.square(h_valid - mean), axis=0)        # biased variance
    rstd = lax.rsqrt(var + 1e-5)
    scale = (g_p * rstd).reshape(1, cout_pad)
    shift = (be_p - mean * g_p * rstd).reshape(1, cout_pad)

    # --- 3) cheap second pass: y = H * scale + shift (large row tiles) --------
    # (input_output_aliases is not used because H is bf16 and y is f32.)
    tm2 = _pick_tile(n_pad, MAX_TILE_BN)
    y = pl.pallas_call(
        _bn_apply_kernel,
        out_shape=jax.ShapeDtypeStruct((n_pad, cout_pad), jnp.float32),
        grid=(n_pad // tm2,),
        in_specs=[
            pl.BlockSpec((tm2, cout_pad), lambda i: (i, 0)),
            pl.BlockSpec((1, cout_pad), lambda i: (0, 0)),
            pl.BlockSpec((1, cout_pad), lambda i: (0, 0)),
        ],
        out_specs=pl.BlockSpec((tm2, cout_pad), lambda i: (i, 0)),
        compiler_params=pltpu.CompilerParams(
            dimension_semantics=("parallel",),
            vmem_limit_bytes=_VMEM_LIMIT_BYTES),
    )(h, scale, shift)

    return y[:n, :cout]


# ------------------------------ JAX glue --------------------------------------
def build_gcn_adjacency(edge_index, edge_weight, num_nodes):
    """Dense A_hat with self-loops and symmetric normalization, matching
    torch_geometric GCNConv defaults (add_self_loops=True, normalize=True)."""
    row, col = edge_index[0], edge_index[1]          # row=src, col=dst
    loop = jnp.arange(num_nodes, dtype=row.dtype)
    row = jnp.concatenate([row, loop])
    col = jnp.concatenate([col, loop])
    w = jnp.concatenate([edge_weight, jnp.ones((num_nodes,), edge_weight.dtype)])
    deg = jnp.zeros((num_nodes,), jnp.float32).at[col].add(w)
    dinv = jnp.where(deg > 0, lax.rsqrt(deg), 0.0)
    norm = dinv[row] * w * dinv[col]
    # out[dst] += norm * x'[src]  =>  A_hat[dst, src] += norm
    a_hat = jnp.zeros((num_nodes, num_nodes), jnp.float32).at[col, row].add(norm)
    return a_hat


# ----------------------------------- main -------------------------------------
if __name__ == "__main__":
    N, C_IN, C_OUT, E = 16, 8, 32, 48

    key = jax.random.PRNGKey(0)
    k_x, k_src, k_dst, k_ew, k_w = jax.random.split(key, 5)

    x = jax.random.normal(k_x, (N, C_IN), jnp.float32)
    edge_index = jnp.stack(
        [
            jax.random.randint(k_src, (E,), 0, N),
            jax.random.randint(k_dst, (E,), 0, N),
        ]
    )
    edge_attr = jax.random.uniform(k_ew, (E,), jnp.float32, 0.1, 1.0)

    # Parameters: GCNConv glorot weight, zero bias; BatchNorm1d gamma=1, beta=0.
    limit = jnp.sqrt(6.0 / (C_IN + C_OUT))
    weight = jax.random.uniform(k_w, (C_OUT, C_IN), jnp.float32, -limit, limit)
    bias = jnp.zeros((C_OUT,), jnp.float32)
    gamma = jnp.ones((C_OUT,), jnp.float32)
    beta = jnp.zeros((C_OUT,), jnp.float32)

    a_hat = build_gcn_adjacency(edge_index, edge_attr, N)

    out = convblock_forward(a_hat, x, weight, bias, gamma, beta)
    jax.block_until_ready(out)

    # Pure-JAX f32 reference (exact PyTorch-module semantics). The kernel runs
    # the aggregation with bf16 A / XW / H (f32 accumulation), so the tolerance
    # reflects bf16 rounding (~1e-3 relative drift).
    ref_h = a_hat @ (x @ weight.T) + bias
    ref_h = jnp.where(ref_h >= 0, ref_h, 0.1 * ref_h)
    m = ref_h.mean(0, keepdims=True)
    v = ((ref_h - m) ** 2).mean(0, keepdims=True)
    ref = (ref_h - m) * lax.rsqrt(v + 1e-5) * gamma + beta
    assert out.shape == (N, C_OUT), f"bad output shape {out.shape}"
    assert jnp.allclose(out, ref, atol=2e-2, rtol=2e-2), "mismatch vs reference"

    print("KERNEL_OK")
</pallas_src>

<mosaic_0001>
module attributes {stable_mosaic.version = 11 : i64} {
  func.func @_gcn_agg_kernel(%arg0: i32, %arg1: i32, %arg2: memref<128x128xbf16, #tpu.memory_space<vmem>>, %arg3: memref<128x8xf32, #tpu.memory_space<vmem>>, %arg4: memref<8x128xf32, #tpu.memory_space<vmem>>, %arg5: memref<1x128xf32, #tpu.memory_space<vmem>>, %arg6: memref<128x128xbf16, #tpu.memory_space<vmem>>, %arg7: memref<128x128xf32, #tpu.memory_space<vmem>>) attributes {dimension_semantics = [#tpu.dimension_semantics<parallel>, #tpu.dimension_semantics<arbitrary>], iteration_bounds = array<i64: 1, 1>, scalar_prefetch = 0 : i64, scratch_operands = 1 : i64, tpu.core_type = #tpu.core_type<tc>, window_params = [{transform_indices = @transform_0, window_bounds = array<i64: 128, 128>}, {transform_indices = @transform_1, window_bounds = array<i64: 128, 8>}, {pipeline_mode = #tpu.pipeline_mode<synchronous>, transform_indices = @transform_2, window_bounds = array<i64: 8, 128>}, {pipeline_mode = #tpu.pipeline_mode<synchronous>, transform_indices = @transform_3, window_bounds = array<i64: 1, 128>}, {transform_indices = @transform_4, window_bounds = array<i64: 128, 128>}]} {
    %c0_i32 = arith.constant 0 : i32
    %0 = arith.cmpi eq, %arg1, %c0_i32 : i32
    %1 = arith.extui %0 : i1 to i32
    %c0_i32_0 = arith.constant 0 : i32
    %2 = arith.cmpi ne, %1, %c0_i32_0 : i32
    scf.if %2 {
      %cst_13 = arith.constant 0.000000e+00 : f32
      %15 = vector.broadcast %cst_13 : f32 to vector<128x128xf32>
      %c0_14 = arith.constant 0 : index
      %c0_15 = arith.constant 0 : index
      %16 = vector.load %arg7[%c0_14, %c0_15] : memref<128x128xf32, #tpu.memory_space<vmem>>, vector<128x128xf32>
      tpu.vector_store %arg7[%c0_14, %c0_15], %15 {strides = array<i32>} : memref<128x128xf32, #tpu.memory_space<vmem>>, vector<128x128xf32>,
    } else {
    }
    %c0 = arith.constant 0 : index
    %c0_1 = arith.constant 0 : index
    %3 = vector.load %arg3[%c0, %c0_1] : memref<128x8xf32, #tpu.memory_space<vmem>>, vector<128x8xf32>
    %c0_2 = arith.constant 0 : index
    %c0_3 = arith.constant 0 : index
    %4 = vector.load %arg4[%c0_2, %c0_3] : memref<8x128xf32, #tpu.memory_space<vmem>>, vector<8x128xf32>
    %cst = arith.constant dense<0.000000e+00> : vector<128x128xf32>
    %5 = tpu.matmul %3, %4, %cst {dimension_numbers = #tpu.dot_dimension_numbers<[1], [0], [0], [1], [0, 0, 1, 1], [], []>} : vector<128x8xf32>, vector<8x128xf32>, vector<128x128xf32> -> vector<128x128xf32>
    %c0_4 = arith.constant 0 : index
    %c0_5 = arith.constant 0 : index
    %6 = vector.load %arg7[%c0_4, %c0_5] : memref<128x128xf32, #tpu.memory_space<vmem>>, vector<128x128xf32>
    %c0_6 = arith.constant 0 : index
    %c0_7 = arith.constant 0 : index
    %7 = vector.load %arg2[%c0_6, %c0_7] : memref<128x128xbf16, #tpu.memory_space<vmem>>, vector<128x128xbf16>
    %8 = arith.truncf %5 : vector<128x128xf32> to vector<128x128xbf16>
    %cst_8 = arith.constant dense<0.000000e+00> : vector<128x128xf32>
    %9 = tpu.matmul %7, %8, %cst_8 {dimension_numbers = #tpu.dot_dimension_numbers<[1], [0], [0], [1], [0, 0, 1, 1], [], []>} : vector<128x128xbf16>, vector<128x128xbf16>, vector<128x128xf32> -> vector<128x128xf32>
    %10 = arith.addf %6, %9 : vector<128x128xf32>
    %c0_9 = arith.constant 0 : index
    %c0_10 = arith.constant 0 : index
    %11 = vector.load %arg7[%c0_9, %c0_10] : memref<128x128xf32, #tpu.memory_space<vmem>>, vector<128x128xf32>
    tpu.vector_store %arg7[%c0_9, %c0_10], %10 {strides = array<i32>} : memref<128x128xf32, #tpu.memory_space<vmem>>, vector<128x128xf32>,
    %c0_i32_11 = arith.constant 0 : i32
    %12 = arith.cmpi eq, %arg1, %c0_i32_11 : i32
    %13 = arith.extui %12 : i1 to i32
    %c0_i32_12 = arith.constant 0 : i32
    %14 = arith.cmpi ne, %13, %c0_i32_12 : i32
    scf.if %14 {
      %c0_13 = arith.constant 0 : index
      %c0_14 = arith.constant 0 : index
      %15 = vector.load %arg7[%c0_13, %c0_14] : memref<128x128xf32, #tpu.memory_space<vmem>>, vector<128x128xf32>
      %c0_15 = arith.constant 0 : index
      %c0_16 = arith.constant 0 : index
      %16 = vector.load %arg5[%c0_15, %c0_16] : memref<1x128xf32, #tpu.memory_space<vmem>>, vector<1x128xf32>
      %17 = vector.broadcast %16 : vector<1x128xf32> to vector<128x128xf32>
      %18 = arith.addf %15, %17 : vector<128x128xf32>
      %cst_17 = arith.constant 0.000000e+00 : f32
      %19 = vector.broadcast %cst_17 : f32 to vector<128x128xf32>
      %20 = arith.cmpf oge, %18, %19 : vector<128x128xf32>
      %cst_18 = arith.constant 1.000000e-01 : f32
      %21 = vector.broadcast %cst_18 : f32 to vector<128x128xf32>
      %22 = arith.mulf %21, %18 : vector<128x128xf32>
      %23 = arith.select %20, %18, %22 : vector<128x128xi1>, vector<128x128xf32>
      %24 = arith.truncf %23 : vector<128x128xf32> to vector<128x128xbf16>
      %c0_19 = arith.constant 0 : index
      %c0_20 = arith.constant 0 : index
      %25 = vector.load %arg6[%c0_19, %c0_20] : memref<128x128xbf16, #tpu.memory_space<vmem>>, vector<128x128xbf16>
      tpu.vector_store %arg6[%c0_19, %c0_20], %24 {strides = array<i32>} : memref<128x128xbf16, #tpu.memory_space<vmem>>, vector<128x128xbf16>,
    } else {
    }
    return
  }
  func.func @transform_0(%arg0: i32, %arg1: i32) -> (i32, i32) {
    %c0_i32 = arith.constant 0 : i32
    return %arg0, %arg1 : i32, i32
  }
  func.func @transform_1(%arg0: i32, %arg1: i32) -> (i32, i32) {
    %c0_i32 = arith.constant 0 : i32
    %c0_i32_0 = arith.constant 0 : i32
    return %arg1, %c0_i32 : i32, i32
  }
  func.func @transform_2(%arg0: i32, %arg1: i32) -> (i32, i32) {
    %c0_i32 = arith.constant 0 : i32
    %c0_i32_0 = arith.constant 0 : i32
    %c0_i32_1 = arith.constant 0 : i32
    return %c0_i32, %c0_i32_0 : i32, i32
  }
  func.func @transform_3(%arg0: i32, %arg1: i32) -> (i32, i32) {
    %c0_i32 = arith.constant 0 : i32
    %c0_i32_0 = arith.constant 0 : i32
    %c0_i32_1 = arith.constant 0 : i32
    return %c0_i32, %c0_i32_0 : i32, i32
  }
  func.func @transform_4(%arg0: i32, %arg1: i32) -> (i32, i32) {
    %c0_i32 = arith.constant 0 : i32
    %c0_i32_0 = arith.constant 0 : i32
    return %arg0, %c0_i32 : i32, i32
  }
}

</mosaic_0001>

<llo_original>
// kernel: tpu_custom_call.1
$region0: #{tpu_custom_call.1}
  #allocation0 [shape = 'u32[]', space=smem, size = 0x4, offset = 0x4, fixed_abs, tag = 'smem constant byte address 0x4 - core index']
  #allocation1 [shape = 'u32[144,128]{1,0:T(1,128)}', space=vmem, size = 0x12000, scoped, tag = 'internal scratch']
  #allocation2 [shape = 'f32[128,128]{1,0:T(8,128)}', space=vmem, size = 0x10000, scoped, tag = 'scratch operand']
  %s0 = inlined_call_operand.vmem [shape: bf16[128,128], index: 0, kind: input, shape index: {}]
  %s1 = inlined_call_operand.vmem [shape: f32[128,8], index: 1, kind: input, shape index: {}]
  %s2 = inlined_call_operand.vmem [shape: f32[8,128], index: 2, kind: input, shape index: {}]
  %s3 = inlined_call_operand.vmem [shape: f32[1,128], index: 3, kind: input, shape index: {}]
  %s4 = inlined_call_operand.hbm [shape: bf16[128,128], index: 4, kind: output, shape index: {}]
  %s5 = sld [smem:[#allocation0]]
  $region34: #{tpu_custom_call.1} parent=0
    _
  %s7 = ssub.s32 1, %s5
  %s8 = scalar_select 0, %s7, %s5
  $region1: #{tpu_custom_call.1} parent=0
    #allocation3 [shape = 'u8[32768]{0}', space=vmem, size = 0x8000, scoped, tag = 'output window, operand 0, single buffered']
    #allocation4 [shape = 's32[1]{0}', space=sflag, size = 0x4, scoped, tag = 'scoped memory for tpu_custom_call.1']
    %9 = vsyncpa [#allocation4], 0
    // Predicated region
    $region2: #{tpu_custom_call.1} parent=1 // pred_check
      _
    $region3: #{tpu_custom_call.1} parent=1 // pred_check_branch
      %11 = sbr.rel (0) target = $region5
    $region4: #{tpu_custom_call.1} parent=1 // pred_region
      _
    $region5: #{tpu_custom_call.1} parent=1 // pred_fallthru
      _
    // Predicated region
    $region6: #{tpu_custom_call.1} parent=1 // pred_check
      _
    $region7: #{tpu_custom_call.1} parent=1 // pred_check_branch
      %13 = sbr.rel (0) target = $region9
    $region8: #{tpu_custom_call.1} parent=1 // pred_region
      _
    $region9: #{tpu_custom_call.1} parent=1 // pred_fallthru
      _
    // Predicated region
    $region10: #{tpu_custom_call.1} parent=1 // pred_check
      _
    $region11: #{tpu_custom_call.1} parent=1 // pred_check_branch
      %15 = sbr.rel (0) target = $region13
    $region12: #{tpu_custom_call.1} parent=1 // pred_region
      _
    $region13: #{tpu_custom_call.1} parent=1 // pred_fallthru
      _
    // Predicated region
    $region14: #{tpu_custom_call.1} parent=1 // pred_check
      _
    $region15: #{tpu_custom_call.1} parent=1 // pred_check_branch
      %17 = sbr.rel (0) target = $region17
    $region16: #{tpu_custom_call.1} parent=1 // pred_region
      _
    $region17: #{tpu_custom_call.1} parent=1 // pred_fallthru
      _
    %p19 = scmp.eq.s32.totalorder 0, 0
    // Predicated region
    $region18: #{tpu_custom_call.1} parent=1 // pred_check
      %p20 = pneg %p19
    $region19: #{tpu_custom_call.1} parent=1 // pred_check_branch
      %22 = sbr.rel (%p20) target = $region21
    $region20: #{tpu_custom_call.1} parent=1 // pred_region
      %23 = vst [vmem:[#allocation2] sm:$0xff] 0.0
      %24 = vst [vmem:[#allocation2 + $0x8] sm:$0xff] 0.0
      %25 = vst [vmem:[#allocation2 + $0x10] sm:$0xff] 0.0
      %26 = vst [vmem:[#allocation2 + $0x18] sm:$0xff] 0.0
      %27 = vst [vmem:[#allocation2 + $0x20] sm:$0xff] 0.0
      %28 = vst [vmem:[#allocation2 + $0x28] sm:$0xff] 0.0
      %29 = vst [vmem:[#allocation2 + $0x30] sm:$0xff] 0.0
      %30 = vst [vmem:[#allocation2 + $0x38] sm:$0xff] 0.0
      %31 = vst [vmem:[#allocation2 + $0x40] sm:$0xff] 0.0
      %32 = vst [vmem:[#allocation2 + $0x48] sm:$0xff] 0.0
      %33 = vst [vmem:[#allocation2 + $0x50] sm:$0xff] 0.0
      %34 = vst [vmem:[#allocation2 + $0x58] sm:$0xff] 0.0
      %35 = vst [vmem:[#allocation2 + $0x60] sm:$0xff] 0.0
      %36 = vst [vmem:[#allocation2 + $0x68] sm:$0xff] 0.0
      %37 = vst [vmem:[#allocation2 + $0x70] sm:$0xff] 0.0
      %38 = vst [vmem:[#allocation2 + $0x78] sm:$0xff] 0.0
    $region21: #{tpu_custom_call.1} parent=1 // pred_fallthru
      _
    %v39 = vld [vmem:[%s1] sm:$0xff]
    %v40 = vld [vmem:[%s1 + $0x8] sm:$0xff]
    %v41 = vld [vmem:[%s1 + $0x10] sm:$0xff]
    %v42 = vld [vmem:[%s1 + $0x18] sm:$0xff]
    %v43 = vld [vmem:[%s1 + $0x20] sm:$0xff]
    %v44 = vld [vmem:[%s1 + $0x28] sm:$0xff]
    %v45 = vld [vmem:[%s1 + $0x30] sm:$0xff]
    %v46 = vld [vmem:[%s1 + $0x38] sm:$0xff]
    %v47 = vld [vmem:[%s1 + $0x40] sm:$0xff]
    %v48 = vld [vmem:[%s1 + $0x48] sm:$0xff]
    %v49 = vld [vmem:[%s1 + $0x50] sm:$0xff]
    %v50 = vld [vmem:[%s1 + $0x58] sm:$0xff]
    %v51 = vld [vmem:[%s1 + $0x60] sm:$0xff]
    %v52 = vld [vmem:[%s1 + $0x68] sm:$0xff]
    %v53 = vld [vmem:[%s1 + $0x70] sm:$0xff]
    %v54 = vld [vmem:[%s1 + $0x78] sm:$0xff]
    %v55 = vld [vmem:[%s2] sm:$0xff]
    %vm56 = vcmask 64512
    %v58 = vsel %vm56, %v39, 0
    %v61 = vsel %vm56, %v40, 0
    %v64 = vsel %vm56, %v41, 0
    %v67 = vsel %vm56, %v42, 0
    %v70 = vsel %vm56, %v43, 0
    %v73 = vsel %vm56, %v44, 0
    %v76 = vsel %vm56, %v45, 0
    %v79 = vsel %vm56, %v46, 0
    %v82 = vsel %vm56, %v47, 0
    %v85 = vsel %vm56, %v48, 0
    %v88 = vsel %vm56, %v49, 0
    %v91 = vsel %vm56, %v50, 0
    %v94 = vsel %vm56, %v51, 0
    %v97 = vsel %vm56, %v52, 0
    %v100 = vsel %vm56, %v53, 0
    %v103 = vsel %vm56, %v54, 0
    %105 = vmatprep.subr.mxu0 0.0
    %106 = vmatpush1.msra.mxu0 %v55
    %107 = vmatprep.subr.mxu0 0.0
    %108 = vmatpush1.msra.mxu0 0.0
    %109 = vmatprep.subr.mxu0 0.0
    %110 = vmatpush1.msra.mxu0 0.0
    %111 = vmatprep.subr.mxu0 0.0
    %112 = vmatpush1.msra.mxu0 0.0
    %113 = vmatprep.subr.mxu0 0.0
    %114 = vmatpush1.msra.mxu0 0.0
    %115 = vmatprep.subr.mxu0 0.0
    %116 = vmatpush1.msra.mxu0 0.0
    %117 = vmatprep.subr.mxu0 0.0
    %118 = vmatpush1.msra.mxu0 0.0
    %119 = vmatprep.subr.mxu0 0.0
    %120 = vmatpush1.msra.mxu0 0.0
    %121 = vmatprep.subr.mxu0 0.0
    %122 = vmatpush1.msra.mxu0 0.0
    %123 = vmatprep.subr.mxu0 0.0
    %124 = vmatpush1.msra.mxu0 0.0
    %125 = vmatprep.subr.mxu0 0.0
    %126 = vmatpush1.msra.mxu0 0.0
    %127 = vmatprep.subr.mxu0 0.0
    %128 = vmatpush1.msra.mxu0 0.0
    %129 = vmatprep.subr.mxu0 0.0
    %130 = vmatpush1.msra.mxu0 0.0
    %131 = vmatprep.subr.mxu0 0.0
    %132 = vmatpush1.msra.mxu0 0.0
    %133 = vmatprep.subr.mxu0 0.0
    %134 = vmatpush1.msra.mxu0 0.0
    %135 = vmatprep.subr.mxu0 0.0
    %136 = vmatpush1.msra.mxu0 0.0
    %137 = vmatprep.subr.mxu0 0.0
    %138 = vmatpush1.msra.mxu0 0.0
    %139 = vmatprep.subr.mxu0 0.0
    %140 = vmatpush1.msra.mxu0 0.0
    %141 = vmatprep.subr.mxu0 0.0
    %142 = vmatpush1.msra.mxu0 0.0
    %143 = vmatprep.subr.mxu0 0.0
    %144 = vmatpush1.msra.mxu0 0.0
    %145 = vmatprep.subr.mxu0 0.0
    %146 = vmatpush1.msra.mxu0 0.0
    %147 = vmatprep.subr.mxu0 0.0
    %148 = vmatpush1.msra.mxu0 0.0
    %149 = vmatprep.subr.mxu0 0.0
    %150 = vmatpush1.msra.mxu0 0.0
    %151 = vmatprep.subr.mxu0 0.0
    %152 = vmatpush1.msra.mxu0 0.0
    %153 = vmatprep.subr.mxu0 0.0
    %154 = vmatpush1.msra.mxu0 0.0
    %155 = vmatprep.subr.mxu0 0.0
    %156 = vmatpush1.msra.mxu0 0.0
    %157 = vmatprep.subr.mxu0 0.0
    %158 = vmatpush1.msra.mxu0 0.0
    %159 = vmatprep.subr.mxu0 0.0
    %160 = vmatpush1.msra.mxu0 0.0
    %161 = vmatprep.subr.mxu0 0.0
    %162 = vmatpush1.msra.mxu0 0.0
    %163 = vmatprep.subr.mxu0 0.0
    %164 = vmatpush1.msra.mxu0 0.0
    %165 = vmatprep.subr.mxu0 0.0
    %166 = vmatpush1.msra.mxu0 0.0
    %167 = vmatprep.subr.mxu0 0.0
    %168 = vmatpush1.msra.mxu0 0.0
    %169 = vmatprep.mubr.f32.mxu0 0.0
    %170 = vmatmul.mubr.f32.gmra.mrb[0].mxu0 %v58
    %v171 = vpop.f32.mrb[0].mxu0
    %v172 = vadd.f32 0.0, %v171
    %v173 = vpop.f32.mrb[0].mxu0
    %174 = vmatprep.mubr.f32.mxu0 0.0
    %175 = vmatmul.mubr.f32.gmra.mrb[0].mxu0 %v61
    %v176 = vpop.f32.mrb[0].mxu0
    %v177 = vadd.f32 0.0, %v176
    %v178 = vpop.f32.mrb[0].mxu0
    %179 = vmatprep.mubr.f32.mxu0 0.0
    %180 = vmatmul.mubr.f32.gmra.mrb[0].mxu0 %v64
    %v181 = vpop.f32.mrb[0].mxu0
    %v182 = vadd.f32 0.0, %v181
    %v183 = vpop.f32.mrb[0].mxu0
    %184 = vmatprep.mubr.f32.mxu0 0.0
    %185 = vmatmul.mubr.f32.gmra.mrb[0].mxu0 %v67
    %v186 = vpop.f32.mrb[0].mxu0
    %v187 = vadd.f32 0.0, %v186
    %v188 = vpop.f32.mrb[0].mxu0
    %189 = vmatprep.mubr.f32.mxu0 0.0
    %190 = vmatmul.mubr.f32.gmra.mrb[0].mxu0 %v70
    %v191 = vpop.f32.mrb[0].mxu0
    %v192 = vadd.f32 0.0, %v191
    %v193 = vpop.f32.mrb[0].mxu0
    %194 = vmatprep.mubr.f32.mxu0 0.0
    %195 = vmatmul.mubr.f32.gmra.mrb[0].mxu0 %v73
    %v196 = vpop.f32.mrb[0].mxu0
    %v197 = vadd.f32 0.0, %v196
    %v198 = vpop.f32.mrb[0].mxu0
    %199 = vmatprep.mubr.f32.mxu0 0.0
    %200 = vmatmul.mubr.f32.gmra.mrb[0].mxu0 %v76
    %v201 = vpop.f32.mrb[0].mxu0
    %v202 = vadd.f32 0.0, %v201
    %v203 = vpop.f32.mrb[0].mxu0
    %204 = vmatprep.mubr.f32.mxu0 0.0
    %205 = vmatmul.mubr.f32.gmra.mrb[0].mxu0 %v79
    %v206 = vpop.f32.mrb[0].mxu0
    %v207 = vadd.f32 0.0, %v206
    %v208 = vpop.f32.mrb[0].mxu0
    %209 = vmatprep.mubr.f32.mxu0 0.0
    %210 = vmatmul.mubr.f32.gmra.mrb[0].mxu0 %v82
    %v211 = vpop.f32.mrb[0].mxu0
    %v212 = vadd.f32 0.0, %v211
    %v213 = vpop.f32.mrb[0].mxu0
    %214 = vmatprep.mubr.f32.mxu0 0.0
    %215 = vmatmul.mubr.f32.gmra.mrb[0].mxu0 %v85
    %v216 = vpop.f32.mrb[0].mxu0
    %v217 = vadd.f32 0.0, %v216
    %v218 = vpop.f32.mrb[0].mxu0
    %219 = vmatprep.mubr.f32.mxu0 0.0
    %220 = vmatmul.mubr.f32.gmra.mrb[0].mxu0 %v88
    %v221 = vpop.f32.mrb[0].mxu0
    %v222 = vadd.f32 0.0, %v221
    %v223 = vpop.f32.mrb[0].mxu0
    %224 = vmatprep.mubr.f32.mxu0 0.0
    %225 = vmatmul.mubr.f32.gmra.mrb[0].mxu0 %v91
    %v226 = vpop.f32.mrb[0].mxu0
    %v227 = vadd.f32 0.0, %v226
    %v228 = vpop.f32.mrb[0].mxu0
    %229 = vmatprep.mubr.f32.mxu0 0.0
    %230 = vmatmul.mubr.f32.gmra.mrb[0].mxu0 %v94
    %v231 = vpop.f32.mrb[0].mxu0
    %v232 = vadd.f32 0.0, %v231
    %v233 = vpop.f32.mrb[0].mxu0
    %234 = vmatprep.mubr.f32.mxu0 0.0
    %235 = vmatmul.mubr.f32.gmra.mrb[0].mxu0 %v97
    %v236 = vpop.f32.mrb[0].mxu0
    %v237 = vadd.f32 0.0, %v236
    %v238 = vpop.f32.mrb[0].mxu0
    %239 = vmatprep.mubr.f32.mxu0 0.0
    %240 = vmatmul.mubr.f32.gmra.mrb[0].mxu0 %v100
    %v241 = vpop.f32.mrb[0].mxu0
    %v242 = vadd.f32 0.0, %v241
    %v243 = vpop.f32.mrb[0].mxu0
    %244 = vmatprep.mubr.f32.mxu0 0.0
    %245 = vmatmul.mubr.f32.gmra.mrb[0].mxu0 %v103
    %v246 = vpop.f32.mrb[0].mxu0
    %v247 = vadd.f32 0.0, %v246
    %v248 = vpop.f32.mrb[0].mxu0
    %249 = vdwg.mxu0
    %v250 = vld [vmem:[#allocation2] sm:$0xff]
    %v251 = vld [vmem:[#allocation2 + $0x8] sm:$0xff]
    %v252 = vld [vmem:[#allocation2 + $0x10] sm:$0xff]
    %v253 = vld [vmem:[#allocation2 + $0x18] sm:$0xff]
    %v254 = vld [vmem:[#allocation2 + $0x20] sm:$0xff]
    %v255 = vld [vmem:[#allocation2 + $0x28] sm:$0xff]
    %v256 = vld [vmem:[#allocation2 + $0x30] sm:$0xff]
    %v257 = vld [vmem:[#allocation2 + $0x38] sm:$0xff]
    %v258 = vld [vmem:[#allocation2 + $0x40] sm:$0xff]
    %v259 = vld [vmem:[#allocation2 + $0x48] sm:$0xff]
    %v260 = vld [vmem:[#allocation2 + $0x50] sm:$0xff]
    %v261 = vld [vmem:[#allocation2 + $0x58] sm:$0xff]
    %v262 = vld [vmem:[#allocation2 + $0x60] sm:$0xff]
    %v263 = vld [vmem:[#allocation2 + $0x68] sm:$0xff]
    %v264 = vld [vmem:[#allocation2 + $0x70] sm:$0xff]
    %v265 = vld [vmem:[#allocation2 + $0x78] sm:$0xff]
    %v266 = vld [vmem:[%s0] sm:$0xf]
    %v267 = vld [vmem:[%s0 + $0x4] sm:$0xf]
    %v268 = vld [vmem:[%s0 + $0x8] sm:$0xf]
    %v269 = vld [vmem:[%s0 + $0xc] sm:$0xf]
    %v270 = vld [vmem:[%s0 + $0x10] sm:$0xf]
    %v271 = vld [vmem:[%s0 + $0x14] sm:$0xf]
    %v272 = vld [vmem:[%s0 + $0x18] sm:$0xf]
    %v273 = vld [vmem:[%s0 + $0x1c] sm:$0xf]
    %v274 = vld [vmem:[%s0 + $0x20] sm:$0xf]
    %v275 = vld [vmem:[%s0 + $0x24] sm:$0xf]
    %v276 = vld [vmem:[%s0 + $0x28] sm:$0xf]
    %v277 = vld [vmem:[%s0 + $0x2c] sm:$0xf]
    %v278 = vld [vmem:[%s0 + $0x30] sm:$0xf]
    %v279 = vld [vmem:[%s0 + $0x34] sm:$0xf]
    %v280 = vld [vmem:[%s0 + $0x38] sm:$0xf]
    %v281 = vld [vmem:[%s0 + $0x3c] sm:$0xf]
    %v282 = vpack.c.bf16 %v177, %v172
    %v283 = vpack.c.bf16 %v187, %v182
    %v284 = vpack.c.bf16 %v197, %v192
    %v285 = vpack.c.bf16 %v207, %v202
    %v286 = vpack.c.bf16 %v217, %v212
    %v287 = vpack.c.bf16 %v227, %v222
    %v288 = vpack.c.bf16 %v237, %v232
    %v289 = vpack.c.bf16 %v247, %v242
    %v306 = vunpack.c.l.b16 %v266
    %v307 = vunpack.c.l.b16 %v267
    %v308 = vunpack.c.l.b16 %v268
    %v309 = vunpack.c.l.b16 %v269
    %v310 = vunpack.c.l.b16 %v270
    %v311 = vunpack.c.l.b16 %v271
    %v312 = vunpack.c.l.b16 %v272
    %v313 = vunpack.c.l.b16 %v273
    %v314 = vunpack.c.l.b16 %v274
    %v315 = vunpack.c.l.b16 %v275
    %v316 = vunpack.c.l.b16 %v276
    %v317 = vunpack.c.l.b16 %v277
    %v318 = vunpack.c.l.b16 %v278
    %v319 = vunpack.c.l.b16 %v279
    %v320 = vunpack.c.l.b16 %v280
    %v321 = vunpack.c.l.b16 %v281
    %v322 = vpack.c.b16 %v307, %v306
    %v323 = vpack.c.b16 %v309, %v308
    %v324 = vpack.c.b16 %v311, %v310
    %v325 = vpack.c.b16 %v313, %v312
    %v326 = vpack.c.b16 %v315, %v314
    %v327 = vpack.c.b16 %v317, %v316
    %v328 = vpack.c.b16 %v319, %v318
    %v329 = vpack.c.b16 %v321, %v320
    %338 = vmatprep.subr.bf16.mxu0 0
    %339 = vmatpush1.bf16.msra.mxu0 %v282
    %340 = vmatprep.subr.bf16.mxu0 0
    %341 = vmatpush1.bf16.msra.mxu0 %v283
    %342 = vmatprep.subr.bf16.mxu0 0
    %343 = vmatpush1.bf16.msra.mxu0 %v284
    %344 = vmatprep.subr.bf16.mxu0 0
    %345 = vmatpush1.bf16.msra.mxu0 %v285
    %346 = vmatprep.subr.bf16.mxu0 0
    %347 = vmatpush1.bf16.msra.mxu0 %v286
    %348 = vmatprep.subr.bf16.mxu0 0
    %349 = vmatpush1.bf16.msra.mxu0 %v287
    %350 = vmatprep.subr.bf16.mxu0 0
    %351 = vmatpush1.bf16.msra.mxu0 %v288
    %352 = vmatprep.subr.bf16.mxu0 0
    %353 = vmatpush1.bf16.msra.mxu0 %v289
    %354 = vmatprep.subr.bf16.mxu0 0
    %355 = vmatpush1.bf16.msra.mxu0 0
    %356 = vmatprep.subr.bf16.mxu0 0
    %357 = vmatpush1.bf16.msra.mxu0 0
    %358 = vmatprep.subr.bf16.mxu0 0
    %359 = vmatpush1.bf16.msra.mxu0 0
    %360 = vmatprep.subr.bf16.mxu0 0
    %361 = vmatpush1.bf16.msra.mxu0 0
    %362 = vmatprep.subr.bf16.mxu0 0
    %363 = vmatpush1.bf16.msra.mxu0 0
    %364 = vmatprep.subr.bf16.mxu0 0
    %365 = vmatpush1.bf16.msra.mxu0 0
    %366 = vmatprep.subr.bf16.mxu0 0
    %367 = vmatpush1.bf16.msra.mxu0 0
    %368 = vmatprep.subr.bf16.mxu0 0
    %369 = vmatpush1.bf16.msra.mxu0 0
    %370 = vmatprep.mubr.bf16.mxu0 0
    %371 = vmatmul.mubr.bf16.gmra.mrb[0].mxu0 %v322
    %v372 = vpop.f32.mrb[0].mxu0
    %v373 = vadd.f32 0.0, %v372
    %v374 = vpop.f32.mrb[0].mxu0
    %v375 = vpop.f32.mrb[0].mxu0
    %v376 = vadd.f32 0.0, %v375
    %v377 = vpop.f32.mrb[0].mxu0
    %378 = vmatprep.mubr.bf16.mxu0 0
    %379 = vmatmul.mubr.bf16.gmra.mrb[0].mxu0 %v323
    %v380 = vpop.f32.mrb[0].mxu0
    %v381 = vadd.f32 0.0, %v380
    %v382 = vpop.f32.mrb[0].mxu0
    %v383 = vpop.f32.mrb[0].mxu0
    %v384 = vadd.f32 0.0, %v383
    %v385 = vpop.f32.mrb[0].mxu0
    %386 = vmatprep.mubr.bf16.mxu0 0
    %387 = vmatmul.mubr.bf16.gmra.mrb[0].mxu0 %v324
    %v388 = vpop.f32.mrb[0].mxu0
    %v389 = vadd.f32 0.0, %v388
    %v390 = vpop.f32.mrb[0].mxu0
    %v391 = vpop.f32.mrb[0].mxu0
    %v392 = vadd.f32 0.0, %v391
    %v393 = vpop.f32.mrb[0].mxu0
    %394 = vmatprep.mubr.bf16.mxu0 0
    %395 = vmatmul.mubr.bf16.gmra.mrb[0].mxu0 %v325
    %v396 = vpop.f32.mrb[0].mxu0
    %v397 = vadd.f32 0.0, %v396
    %v398 = vpop.f32.mrb[0].mxu0
    %v399 = vpop.f32.mrb[0].mxu0
    %v400 = vadd.f32 0.0, %v399
    %v401 = vpop.f32.mrb[0].mxu0
    %402 = vmatprep.mubr.bf16.mxu0 0
    %403 = vmatmul.mubr.bf16.gmra.mrb[0].mxu0 %v326
    %v404 = vpop.f32.mrb[0].mxu0
    %v405 = vadd.f32 0.0, %v404
    %v406 = vpop.f32.mrb[0].mxu0
    %v407 = vpop.f32.mrb[0].mxu0
    %v408 = vadd.f32 0.0, %v407
    %v409 = vpop.f32.mrb[0].mxu0
    %410 = vmatprep.mubr.bf16.mxu0 0
    %411 = vmatmul.mubr.bf16.gmra.mrb[0].mxu0 %v327
    %v412 = vpop.f32.mrb[0].mxu0
    %v413 = vadd.f32 0.0, %v412
    %v414 = vpop.f32.mrb[0].mxu0
    %v415 = vpop.f32.mrb[0].mxu0
    %v416 = vadd.f32 0.0, %v415
    %v417 = vpop.f32.mrb[0].mxu0
    %418 = vmatprep.mubr.bf16.mxu0 0
    %419 = vmatmul.mubr.bf16.gmra.mrb[0].mxu0 %v328
    %v420 = vpop.f32.mrb[0].mxu0
    %v421 = vadd.f32 0.0, %v420
    %v422 = vpop.f32.mrb[0].mxu0
    %v423 = vpop.f32.mrb[0].mxu0
    %v424 = vadd.f32 0.0, %v423
    %v425 = vpop.f32.mrb[0].mxu0
    %426 = vmatprep.mubr.bf16.mxu0 0
    %427 = vmatmul.mubr.bf16.gmra.mrb[0].mxu0 %v329
    %v428 = vpop.f32.mrb[0].mxu0
    %v429 = vadd.f32 0.0, %v428
    %v430 = vpop.f32.mrb[0].mxu0
    %v431 = vpop.f32.mrb[0].mxu0
    %v432 = vadd.f32 0.0, %v431
    %v433 = vpop.f32.mrb[0].mxu0
    %434 = vdwg.mxu0
    %v435 = vadd.f32 %v250, %v373
    %v436 = vadd.f32 %v251, %v376
    %v437 = vadd.f32 %v252, %v381
    %v438 = vadd.f32 %v253, %v384
    %v439 = vadd.f32 %v254, %v389
    %v440 = vadd.f32 %v255, %v392
    %v441 = vadd.f32 %v256, %v397
    %v442 = vadd.f32 %v257, %v400
    %v443 = vadd.f32 %v258, %v405
    %v444 = vadd.f32 %v259, %v408
    %v445 = vadd.f32 %v260, %v413
    %v446 = vadd.f32 %v261, %v416
    %v447 = vadd.f32 %v262, %v421
    %v448 = vadd.f32 %v263, %v424
    %v449 = vadd.f32 %v264, %v429
    %v450 = vadd.f32 %v265, %v432
    %451 = vst [vmem:[#allocation2] sm:$0xff] %v435
    %452 = vst [vmem:[#allocation2 + $0x8] sm:$0xff] %v436
    %453 = vst [vmem:[#allocation2 + $0x10] sm:$0xff] %v437
    %454 = vst [vmem:[#allocation2 + $0x18] sm:$0xff] %v438
    %455 = vst [vmem:[#allocation2 + $0x20] sm:$0xff] %v439
    %456 = vst [vmem:[#allocation2 + $0x28] sm:$0xff] %v440
    %457 = vst [vmem:[#allocation2 + $0x30] sm:$0xff] %v441
    %458 = vst [vmem:[#allocation2 + $0x38] sm:$0xff] %v442
    %459 = vst [vmem:[#allocation2 + $0x40] sm:$0xff] %v443
    %460 = vst [vmem:[#allocation2 + $0x48] sm:$0xff] %v444
    %461 = vst [vmem:[#allocation2 + $0x50] sm:$0xff] %v445
    %462 = vst [vmem:[#allocation2 + $0x58] sm:$0xff] %v446
    %463 = vst [vmem:[#allocation2 + $0x60] sm:$0xff] %v447
    %464 = vst [vmem:[#allocation2 + $0x68] sm:$0xff] %v448
    %465 = vst [vmem:[#allocation2 + $0x70] sm:$0xff] %v449
    %466 = vst [vmem:[#allocation2 + $0x78] sm:$0xff] %v450
    // Predicated region
    $region22: #{tpu_custom_call.1} parent=1 // pred_check
      %p467 = pneg %p19
    $region23: #{tpu_custom_call.1} parent=1 // pred_check_branch
      %469 = sbr.rel (%p467) target = $region25
    $region24: #{tpu_custom_call.1} parent=1 // pred_region
      %v470 = vld [vmem:[#allocation2] sm:$0xff]
      %v471 = vld [vmem:[#allocation2 + $0x8] sm:$0xff]
      %v472 = vld [vmem:[#allocation2 + $0x10] sm:$0xff]
      %v473 = vld [vmem:[#allocation2 + $0x18] sm:$0xff]
      %v474 = vld [vmem:[#allocation2 + $0x20] sm:$0xff]
      %v475 = vld [vmem:[#allocation2 + $0x28] sm:$0xff]
      %v476 = vld [vmem:[#allocation2 + $0x30] sm:$0xff]
      %v477 = vld [vmem:[#allocation2 + $0x38] sm:$0xff]
      %v478 = vld [vmem:[#allocation2 + $0x40] sm:$0xff]
      %v479 = vld [vmem:[#allocation2 + $0x48] sm:$0xff]
      %v480 = vld [vmem:[#allocation2 + $0x50] sm:$0xff]
      %v481 = vld [vmem:[#allocation2 + $0x58] sm:$0xff]
      %v482 = vld [vmem:[#allocation2 + $0x60] sm:$0xff]
      %v483 = vld [vmem:[#allocation2 + $0x68] sm:$0xff]
      %v484 = vld [vmem:[#allocation2 + $0x70] sm:$0xff]
      %v485 = vld [vmem:[#allocation2 + $0x78] sm:$0xff]
      %v486 = vld [vmem:[%s3] sm:$0x1]
      %v488 = vlaneseq
      %v489 = vshrl.u32 %v488, 7
      %v490 = vsub.s32 0, %v489
      %v491 = vrot.slane %v486, %v490
      %v493 = vadd.f32 %v470, %v491
      %v494 = vadd.f32 %v471, %v491
      %v495 = vadd.f32 %v472, %v491
      %v496 = vadd.f32 %v473, %v491
      %v497 = vadd.f32 %v474, %v491
      %v498 = vadd.f32 %v475, %v491
      %v499 = vadd.f32 %v476, %v491
      %v500 = vadd.f32 %v477, %v491
      %v501 = vadd.f32 %v478, %v491
      %v502 = vadd.f32 %v479, %v491
      %v503 = vadd.f32 %v480, %v491
      %v504 = vadd.f32 %v481, %v491
      %v505 = vadd.f32 %v482, %v491
      %v506 = vadd.f32 %v483, %v491
      %v507 = vadd.f32 %v484, %v491
      %v508 = vadd.f32 %v485, %v491
      %vm509 = vcmp.ge.f32.partialorder %v493, 0.0
      %vm510 = vcmp.ge.f32.partialorder %v494, 0.0
      %vm511 = vcmp.ge.f32.partialorder %v495, 0.0
      %vm512 = vcmp.ge.f32.partialorder %v496, 0.0
      %vm513 = vcmp.ge.f32.partialorder %v497, 0.0
      %vm514 = vcmp.ge.f32.partialorder %v498, 0.0
      %vm515 = vcmp.ge.f32.partialorder %v499, 0.0
      %vm516 = vcmp.ge.f32.partialorder %v500, 0.0
      %vm517 = vcmp.ge.f32.partialorder %v501, 0.0
      %vm518 = vcmp.ge.f32.partialorder %v502, 0.0
      %vm519 = vcmp.ge.f32.partialorder %v503, 0.0
      %vm520 = vcmp.ge.f32.partialorder %v504, 0.0
      %vm521 = vcmp.ge.f32.partialorder %v505, 0.0
      %vm522 = vcmp.ge.f32.partialorder %v506, 0.0
      %vm523 = vcmp.ge.f32.partialorder %v507, 0.0
      %vm524 = vcmp.ge.f32.partialorder %v508, 0.0
      %v525 = vmul.f32 %v493, 0.1
      %v526 = vmul.f32 %v494, 0.1
      %v527 = vmul.f32 %v495, 0.1
      %v528 = vmul.f32 %v496, 0.1
      %v529 = vmul.f32 %v497, 0.1
      %v530 = vmul.f32 %v498, 0.1
      %v531 = vmul.f32 %v499, 0.1
      %v532 = vmul.f32 %v500, 0.1
      %v533 = vmul.f32 %v501, 0.1
      %v534 = vmul.f32 %v502, 0.1
      %v535 = vmul.f32 %v503, 0.1
      %v536 = vmul.f32 %v504, 0.1
      %v537 = vmul.f32 %v505, 0.1
      %v538 = vmul.f32 %v506, 0.1
      %v539 = vmul.f32 %v507, 0.1
      %v540 = vmul.f32 %v508, 0.1
      %v541 = vsel %vm509, %v493, %v525
      %v542 = vsel %vm510, %v494, %v526
      %v543 = vsel %vm511, %v495, %v527
      %v544 = vsel %vm512, %v496, %v528
      %v545 = vsel %vm513, %v497, %v529
      %v546 = vsel %vm514, %v498, %v530
      %v547 = vsel %vm515, %v499, %v531
      %v548 = vsel %vm516, %v500, %v532
      %v549 = vsel %vm517, %v501, %v533
      %v550 = vsel %vm518, %v502, %v534
      %v551 = vsel %vm519, %v503, %v535
      %v552 = vsel %vm520, %v504, %v536
      %v553 = vsel %vm521, %v505, %v537
      %v554 = vsel %vm522, %v506, %v538
      %v555 = vsel %vm523, %v507, %v539
      %v556 = vsel %vm524, %v508, %v540
      %v557 = vpack.c.bf16 %v542, %v541
      %v558 = vpack.c.bf16 %v544, %v543
      %v559 = vpack.c.bf16 %v546, %v545
      %v560 = vpack.c.bf16 %v548, %v547
      %v561 = vpack.c.bf16 %v550, %v549
      %v562 = vpack.c.bf16 %v552, %v551
      %v563 = vpack.c.bf16 %v554, %v553
      %v564 = vpack.c.bf16 %v556, %v555
      %v573 = vunpack.c.l.b16 %v557
      %v574 = vunpack.c.h.b16 %v557
      %v575 = vunpack.c.l.b16 %v558
      %v576 = vunpack.c.h.b16 %v558
      %v577 = vunpack.c.l.b16 %v559
      %v578 = vunpack.c.h.b16 %v559
      %v579 = vunpack.c.l.b16 %v560
      %v580 = vunpack.c.h.b16 %v560
      %v581 = vunpack.c.l.b16 %v561
      %v582 = vunpack.c.h.b16 %v561
      %v583 = vunpack.c.l.b16 %v562
      %v584 = vunpack.c.h.b16 %v562
      %v585 = vunpack.c.l.b16 %v563
      %v586 = vunpack.c.h.b16 %v563
      %v587 = vunpack.c.l.b16 %v564
      %v588 = vunpack.c.h.b16 %v564
      %v589 = vpack.c.b16 %v573, %v573
      %v590 = vpack.c.b16 %v574, %v574
      %v591 = vpack.c.b16 %v575, %v575
      %v592 = vpack.c.b16 %v576, %v576
      %v593 = vpack.c.b16 %v577, %v577
      %v594 = vpack.c.b16 %v578, %v578
      %v595 = vpack.c.b16 %v579, %v579
      %v596 = vpack.c.b16 %v580, %v580
      %v597 = vpack.c.b16 %v581, %v581
      %v598 = vpack.c.b16 %v582, %v582
      %v599 = vpack.c.b16 %v583, %v583
      %v600 = vpack.c.b16 %v584, %v584
      %v601 = vpack.c.b16 %v585, %v585
      %v602 = vpack.c.b16 %v586, %v586
      %v603 = vpack.c.b16 %v587, %v587
      %v604 = vpack.c.b16 %v588, %v588
      %621 = vst [vmem:[#allocation3] sm:$0xf] %v589
      %622 = vst [vmem:[#allocation3 + $0x4] sm:$0xf] %v590
      %623 = vst [vmem:[#allocation3 + $0x8] sm:$0xf] %v591
      %624 = vst [vmem:[#allocation3 + $0xc] sm:$0xf] %v592
      %625 = vst [vmem:[#allocation3 + $0x10] sm:$0xf] %v593
      %626 = vst [vmem:[#allocation3 + $0x14] sm:$0xf] %v594
      %627 = vst [vmem:[#allocation3 + $0x18] sm:$0xf] %v595
      %628 = vst [vmem:[#allocation3 + $0x1c] sm:$0xf] %v596
      %629 = vst [vmem:[#allocation3 + $0x20] sm:$0xf] %v597
      %630 = vst [vmem:[#allocation3 + $0x24] sm:$0xf] %v598
      %631 = vst [vmem:[#allocation3 + $0x28] sm:$0xf] %v599
      %632 = vst [vmem:[#allocation3 + $0x2c] sm:$0xf] %v600
      %633 = vst [vmem:[#allocation3 + $0x30] sm:$0xf] %v601
      %634 = vst [vmem:[#allocation3 + $0x34] sm:$0xf] %v602
      %635 = vst [vmem:[#allocation3 + $0x38] sm:$0xf] %v603
      %636 = vst [vmem:[#allocation3 + $0x3c] sm:$0xf] %v604
    $region25: #{tpu_custom_call.1} parent=1 // pred_fallthru
      _
    // Predicated region
    $region26: #{tpu_custom_call.1} parent=1 // pred_check
      _
    $region27: #{tpu_custom_call.1} parent=1 // pred_check_branch
      %638 = sbr.rel (0) target = $region29
    $region28: #{tpu_custom_call.1} parent=1 // pred_region
      %s640 = ssub.s32 1024, 1024
      %641 = vsyncadd [#allocation4], %s640
      %s642 = sshll.u32 [#allocation3], 4
      %s643 = int_to_ptr.vmem [resolvable:$true] %s642
      %648 = dma.vmem_to_hbm [thread:$0]  %s643, 1024, %s4, [#allocation4], 64, 64, 4
    $region29: #{tpu_custom_call.1} parent=1 // pred_fallthru
      _
    // Predicated region
    $region30: #{tpu_custom_call.1} parent=1 // pred_check
      _
    $region31: #{tpu_custom_call.1} parent=1 // pred_check_branch
      %650 = sbr.rel (0) target = $region33
    $region32: #{tpu_custom_call.1} parent=1 // pred_region
      %651 = dma.done [#allocation4], 1024
    $region33: #{tpu_custom_call.1} parent=1 // pred_fallthru
      _
    %652 = vsyncpa [#allocation4], 1

</llo_original>
